<compile_context>
chip_gen: v7x
topology: tpu7x:2x2x1
jax: 0.10.0
libtpu: 0.0.40
codegen_flags: <defaults>
</compile_context>

<pallas_src>
import functools

import jax
import jax.numpy as jnp
from jax.experimental import pallas as pl
from jax.experimental.pallas import tpu as pltpu

_LANE = 128  # lane width; halo-block width in the multi-tile path


def _dsconv_kernel(cur_ref, lh_ref, rh_ref, w2_ref, b2_ref, o_ref, s_ref, *,
                   ksize, pad_left, seq_len, num_tiles, dot_precision):
    # cur_ref: (1, C_in, TL)   current L tile of the raw input
    # lh_ref : (1, C_in, HW)   left halo (previous 128 cols; tiny dummy if T==1)
    # rh_ref : (1, C_in, HW)   right halo (next 128 cols; tiny dummy if T==1)
    # w2_ref : (K, C_out, Cp)  fused depthwise*pointwise weights (zero-padded Cp)
    # b2_ref : (C_out, 1)      fused bias, f32
    # o_ref  : (1, C_out, TL)
    # s_ref  : (Cp, TL)        shifted-window scratch, input dtype
    t = pl.program_id(1)
    L = seq_len
    T = num_tiles
    TL = o_ref.shape[2]
    c_in = cur_ref.shape[1]
    cp = s_ref.shape[0]
    hw = lh_ref.shape[2]
    pleft = pad_left
    pright = ksize - 1 - pleft

    # Padded W2 columns are zero, but stale VMEM could hold NaNs: zero the
    # channel-padding rows of the scratch (only emitted when C_in is unaligned).
    if cp > c_in:
        s_ref[c_in:cp, :] = jnp.zeros((cp - c_in, TL), s_ref.dtype)

    # Tiles that contain right-boundary (reflected) output columns: at most the
    # last two (the last tile may hold fewer than `pright` valid columns).
    if pright > 0:
        right_tiles = sorted({min(j // TL, T - 1)
                              for j in range(max(L - pright, 0), L)})
    else:
        right_tiles = []

    acc = None
    for k in range(ksize):
        d = k - pleft                       # static shift for this tap
        if d == 0 and cp == c_in:
            rhs = cur_ref[0]                # aligned channels: no copy needed
        else:
            if d == 0:
                s_ref[0:c_in, :] = cur_ref[0]
            elif d > 0:
                # interior: column j sources x[:, t*TL + j + d]
                s_ref[0:c_in, 0:TL - d] = cur_ref[0, :, d:TL]
                s_ref[0:c_in, TL - d:TL] = rh_ref[0, :, 0:d]
                # right boundary: valid outputs whose source crosses L take the
                # reflected column 2*(L-1) - src (all positions are static).
                for tt in right_tiles:
                    j_lo = max(L - d, tt * TL) - tt * TL
                    j_hi = min((tt + 1) * TL, L) - tt * TL
                    if j_hi <= j_lo:
                        continue

                    @pl.when(t == tt)
                    def _(tt=tt, d=d, j_lo=j_lo, j_hi=j_hi):
                        for j in range(j_lo, j_hi):
                            src = 2 * (L - 1) - (tt * TL + j + d)
                            loc = src - tt * TL
                            if loc >= TL:
                                s_ref[0:c_in, j:j + 1] = (
                                    rh_ref[0, :, loc - TL:loc - TL + 1])
                            elif loc >= 0:
                                s_ref[0:c_in, j:j + 1] = (
                                    cur_ref[0, :, loc:loc + 1])
                            else:
                                s_ref[0:c_in, j:j + 1] = (
                                    lh_ref[0, :, hw + loc:hw + loc + 1])
            else:
                m = -d
                s_ref[0:c_in, m:TL] = cur_ref[0, :, 0:TL - m]
                s_ref[0:c_in, 0:m] = lh_ref[0, :, hw - m:hw]

                # left boundary (tile 0): reflected columns are x[:, m - j].
                @pl.when(t == 0)
                def _(m=m):
                    for j in range(m):
                        src = m - j
                        s_ref[0:c_in, j:j + 1] = cur_ref[0, :, src:src + 1]
            rhs = s_ref[...]

        term = jnp.dot(w2_ref[k], rhs, preferred_element_type=jnp.float32,
                       precision=dot_precision)
        acc = term if acc is None else acc + term

    y = jnp.maximum(acc + b2_ref[...], 0.0)
    o_ref[0] = y.astype(o_ref.dtype)


def _round_up(v, m):
    return -(-v // m) * m


def _vmem_limit_bytes():
    """Generation-aware scoped-VMEM limit: headroom on v7x (64 MiB/core) while
    using more of v5e/v6e's 128 MiB (review feedback)."""
    cap = 64 * 1024 * 1024            # conservative default (v7x per-TensorCore)
    try:
        info = pltpu.get_tpu_info()
        cap = int(getattr(info, "vmem_capacity_bytes", cap)) or cap
    except Exception:
        pass
    return max(32 * 1024 * 1024, min(96 * 1024 * 1024, cap - 16 * 1024 * 1024))


def _choose_tile_l(L, cp, c_out, itemsize, vmem_limit):
    """Pick the L tile.  Per-column bytes count the double-buffered in/out tiles
    *and* the in-kernel temporaries (shifted-window scratch, one loaded tile,
    f32 accumulator / matmul result / activation), per review feedback."""
    per_col = (2 + 1 + 1) * cp * itemsize       # in dbl-buf + scratch + loaded value
    per_col += 2 * c_out * itemsize             # out dbl-buf
    per_col += 3 * c_out * 4                    # f32 acc + dot result + pre-store temp
    budget = vmem_limit // 2                    # headroom: halos, weights, compiler scratch
    tl = int(budget // max(per_col, 1))
    if L <= max(tl, _LANE):
        return L                                # single exact tile: no halos, no clipping
    cap = 4096 if vmem_limit >= 80 * 1024 * 1024 else 2048
    return max(_LANE, min(cap, (tl // _LANE) * _LANE))


def depthwise_separable_conv1d(x_ncl, dw_w, dw_b, pw_w, pw_b, kernel_size, *,
                               tile_l=None, dot_precision=None):
    """relu(pointwise(depthwise(reflection_pad(x)))).

    x_ncl: (N, C_in, L);  dw_w: (C_in, K)  (PyTorch (C_in,1,K) squeezed);
    dw_b: (C_in,);  pw_w: (C_out, C_in)  (PyTorch (C_out,C_in,1) squeezed);
    pw_b: (C_out,).  Returns (N, C_out, L) in x's dtype.

    dot_precision: optional lax.Precision for the float32 MXU path.
    """
    N, C_in, L = x_ncl.shape
    C_out = pw_w.shape[0]
    K = int(kernel_size)
    assert 1 <= K <= _LANE, "kernel_size too large for the 128-column halo"
    assert L >= K, "sequence too short for reflection padding"
    if x_ncl.dtype not in (jnp.float32, jnp.bfloat16):
        x_ncl = x_ncl.astype(jnp.float32)

    pad_left = K // 2
    pad_right = pad_left if K % 2 != 0 else pad_left - 1
    compute_dtype = jnp.bfloat16 if x_ncl.dtype == jnp.bfloat16 else jnp.float32
    cp_mult = 16 if compute_dtype == jnp.bfloat16 else 8  # dtype-native sublane pack
    Cp = _round_up(C_in, cp_mult)

    # Fuse depthwise into pointwise (all MACs become MXU matmuls):
    #   y[o, j] = sum_k (pw_w[o,:] * dw_w[:,k]) @ x_reflect[:, j + k - pad_left] + b2[o]
    # Weight prep is tiny (no HBM pass over x); padded channels get zero weights.
    w2 = (pw_w.astype(jnp.float32)[None, :, :] *
          dw_w.astype(jnp.float32).T[:, None, :])             # (K, C_out, C_in)
    w2 = jnp.pad(w2, ((0, 0), (0, 0), (0, Cp - C_in))).astype(compute_dtype)
    b2 = (pw_w.astype(jnp.float32) @ dw_b.astype(jnp.float32) +
          pw_b.astype(jnp.float32)).reshape(C_out, 1)         # (C_out, 1) f32

    vmem_limit = _vmem_limit_bytes()
    TL = int(tile_l) if tile_l is not None else _choose_tile_l(
        L, Cp, C_out, x_ncl.dtype.itemsize, vmem_limit)
    TL = min(TL, L)
    T = -(-L // TL)

    if T == 1:
        # One exact L tile: boundary columns are rebuilt from in-tile reflections,
        # so the halo inputs are a tiny dummy (no re-read of x).
        halo_w = max(pad_left, pad_right, 1)
        halo = jnp.zeros((1, C_in, halo_w), x_ncl.dtype)
        lh_arg = rh_arg = halo
        cur_spec = pl.BlockSpec((1, C_in, L), lambda n, t: (n, 0, 0))
        lh_spec = rh_spec = pl.BlockSpec((1, C_in, halo_w), lambda n, t: (0, 0, 0))
        out_spec = pl.BlockSpec((1, C_out, L), lambda n, t: (n, 0, 0))
    else:
        assert TL % _LANE == 0, "multi-tile path needs a lane-aligned tile"
        sb = TL // _LANE
        rmax = max(-(-L // _LANE) - 1, 0)
        lh_arg = rh_arg = x_ncl
        cur_spec = pl.BlockSpec((1, C_in, TL), lambda n, t: (n, 0, t))
        lh_spec = pl.BlockSpec(
            (1, C_in, _LANE), lambda n, t: (n, 0, jnp.maximum(t * sb - 1, 0)))
        rh_spec = pl.BlockSpec(
            (1, C_in, _LANE), lambda n, t: (n, 0, jnp.minimum((t + 1) * sb, rmax)))
        out_spec = pl.BlockSpec((1, C_out, TL), lambda n, t: (n, 0, t))

    kernel = functools.partial(
        _dsconv_kernel, ksize=K, pad_left=pad_left, seq_len=L, num_tiles=T,
        dot_precision=dot_precision)

    return pl.pallas_call(
        kernel,
        out_shape=jax.ShapeDtypeStruct((N, C_out, L), x_ncl.dtype),
        grid_spec=pltpu.PrefetchScalarGridSpec(
            num_scalar_prefetch=0,
            grid=(N, T),
            in_specs=[cur_spec, lh_spec, rh_spec,
                      pl.BlockSpec((K, C_out, Cp), lambda n, t: (0, 0, 0)),
                      pl.BlockSpec((C_out, 1), lambda n, t: (0, 0))],
            out_specs=out_spec,
            scratch_shapes=[pltpu.VMEM((Cp, TL), x_ncl.dtype)],
        ),
        compiler_params=pltpu.CompilerParams(
            dimension_semantics=("parallel", "parallel"),
            vmem_limit_bytes=vmem_limit),
    )(x_ncl, lh_arg, rh_arg, w2, b2)


def _reference(x_ncl, dw_w, dw_b, pw_w, pw_b, kernel_size):
    """Pure-JAX f32 reference matching the PyTorch module."""
    N, C_in, L = x_ncl.shape
    K = kernel_size
    pad_left = K // 2
    pad_right = pad_left if K % 2 != 0 else pad_left - 1
    xp = jnp.pad(x_ncl.astype(jnp.float32),
                 ((0, 0), (0, 0), (pad_left, pad_right)), mode="reflect")
    dw = jnp.zeros((N, C_in, L), jnp.float32)
    for k in range(K):
        dw = dw + xp[:, :, k:k + L] * dw_w.astype(jnp.float32)[None, :, k, None]
    dw = dw + dw_b.astype(jnp.float32)[None, :, None]
    pw = (jnp.einsum("ncl,oc->nol", dw, pw_w.astype(jnp.float32)) +
          pw_b.astype(jnp.float32)[None, :, None])
    return jnp.maximum(pw, 0.0).astype(x_ncl.dtype)


if __name__ == "__main__":
    def _run_case(seed, n, c_in, c_out, seq, ksz, tile_l=None):
        k1, k2, k3, k4, k5 = jax.random.split(
            jax.random.fold_in(jax.random.PRNGKey(0), seed), 5)
        # Small-integer-valued inputs: every product/sum is exact in f32 and as
        # a bf16 MXU operand, so this check verifies the kernel's indexing /
        # reflection / fusion structure exactly on any TPU generation.
        x = jax.random.randint(k1, (n, c_in, seq), -4, 5).astype(jnp.float32) / 4.0
        dw_w = jax.random.randint(k2, (c_in, ksz), -4, 5).astype(jnp.float32) / 8.0
        dw_b = jax.random.randint(k3, (c_in,), -4, 5).astype(jnp.float32) / 8.0
        pw_w = jax.random.randint(k4, (c_out, c_in), -4, 5).astype(jnp.float32) / 8.0
        pw_b = jax.random.randint(k5, (c_out,), -4, 5).astype(jnp.float32) / 8.0

        out = depthwise_separable_conv1d(x, dw_w, dw_b, pw_w, pw_b, ksz,
                                         tile_l=tile_l)
        out = jax.block_until_ready(out)
        ref = _reference(x, dw_w, dw_b, pw_w, pw_b, ksz)
        assert out.shape == (n, c_out, seq)
        err = float(jnp.max(jnp.abs(out - ref)))
        assert err <= 1e-5, f"max abs error {err}"

    # batch=2, channels 4 -> 8, L=16 (module-consistent small shapes)
    _run_case(0, n=2, c_in=4, c_out=8, seq=16, ksz=3)               # odd K, single tile
    _run_case(1, n=2, c_in=4, c_out=8, seq=16, ksz=4)               # even K (asymmetric pad)
    _run_case(2, n=2, c_in=4, c_out=8, seq=384, ksz=5, tile_l=128)  # multi-tile + halos

    print("KERNEL_OK")
</pallas_src>

<mosaic_0001>
module attributes {stable_mosaic.version = 11 : i64} {
  func.func @_dsconv_kernel(%arg0: i32, %arg1: i32, %arg2: memref<1x4x16xf32, #tpu.memory_space<vmem>>, %arg3: memref<1x4x1xf32, #tpu.memory_space<vmem>>, %arg4: memref<1x4x1xf32, #tpu.memory_space<vmem>>, %arg5: memref<3x8x8xf32, #tpu.memory_space<vmem>>, %arg6: memref<8x1xf32, #tpu.memory_space<vmem>>, %arg7: memref<1x8x16xf32, #tpu.memory_space<vmem>>, %arg8: memref<8x16xf32, #tpu.memory_space<vmem>>) attributes {dimension_semantics = [#tpu.dimension_semantics<parallel>, #tpu.dimension_semantics<parallel>], iteration_bounds = array<i64: 2, 1>, scalar_prefetch = 0 : i64, scratch_operands = 1 : i64, tpu.core_type = #tpu.core_type<tc>, window_params = [{transform_indices = @transform_0, window_bounds = array<i64: 1, 4, 16>}, {pipeline_mode = #tpu.pipeline_mode<synchronous>, transform_indices = @transform_1, window_bounds = array<i64: 1, 4, 1>}, {pipeline_mode = #tpu.pipeline_mode<synchronous>, transform_indices = @transform_2, window_bounds = array<i64: 1, 4, 1>}, {pipeline_mode = #tpu.pipeline_mode<synchronous>, transform_indices = @transform_3, window_bounds = array<i64: 3, 8, 8>}, {pipeline_mode = #tpu.pipeline_mode<synchronous>, transform_indices = @transform_4, window_bounds = array<i64: 8, 1>}, {transform_indices = @transform_5, window_bounds = array<i64: 1, 8, 16>}]} {
    %cst = arith.constant 0.000000e+00 : f32
    %0 = vector.broadcast %cst : f32 to vector<4x16xf32>
    %c4 = arith.constant 4 : index
    %c0 = arith.constant 0 : index
    %1 = vector.load %arg8[%c4, %c0] : memref<8x16xf32, #tpu.memory_space<vmem>>, vector<4x16xf32>
    tpu.vector_store %arg8[%c4, %c0], %0 {strides = array<i32>} : memref<8x16xf32, #tpu.memory_space<vmem>>, vector<4x16xf32>,
    %c0_0 = arith.constant 0 : index
    %c0_1 = arith.constant 0 : index
    %c0_2 = arith.constant 0 : index
    %2 = vector.load %arg2[%c0_0, %c0_1, %c0_2] : memref<1x4x16xf32, #tpu.memory_space<vmem>>, vector<1x4x15xf32>
    %3 = vector.shape_cast %2 : vector<1x4x15xf32> to vector<4x15xf32>
    %c0_3 = arith.constant 0 : index
    %c1 = arith.constant 1 : index
    %4 = vector.load %arg8[%c0_3, %c1] : memref<8x16xf32, #tpu.memory_space<vmem>>, vector<4x15xf32>
    tpu.vector_store %arg8[%c0_3, %c1], %3 {strides = array<i32>} : memref<8x16xf32, #tpu.memory_space<vmem>>, vector<4x15xf32>,
    %c0_4 = arith.constant 0 : index
    %c0_5 = arith.constant 0 : index
    %c0_6 = arith.constant 0 : index
    %5 = vector.load %arg3[%c0_4, %c0_5, %c0_6] : memref<1x4x1xf32, #tpu.memory_space<vmem>>, vector<1x4x1xf32>
    %6 = vector.shape_cast %5 : vector<1x4x1xf32> to vector<4x1xf32>
    %c0_7 = arith.constant 0 : index
    %c0_8 = arith.constant 0 : index
    %7 = vector.load %arg8[%c0_7, %c0_8] : memref<8x16xf32, #tpu.memory_space<vmem>>, vector<4x1xf32>
    tpu.vector_store %arg8[%c0_7, %c0_8], %6 {strides = array<i32>} : memref<8x16xf32, #tpu.memory_space<vmem>>, vector<4x1xf32>,
    %c0_i32 = arith.constant 0 : i32
    %8 = arith.cmpi eq, %arg1, %c0_i32 : i32
    %9 = arith.extui %8 : i1 to i32
    %c0_i32_9 = arith.constant 0 : i32
    %10 = arith.cmpi ne, %9, %c0_i32_9 : i32
    scf.if %10 {
      %c0_49 = arith.constant 0 : index
      %c0_50 = arith.constant 0 : index
      %c1_51 = arith.constant 1 : index
      %45 = vector.load %arg2[%c0_49, %c0_50, %c1_51] : memref<1x4x16xf32, #tpu.memory_space<vmem>>, vector<1x4x1xf32>
      %46 = vector.shape_cast %45 : vector<1x4x1xf32> to vector<4x1xf32>
      %c0_52 = arith.constant 0 : index
      %c0_53 = arith.constant 0 : index
      %47 = vector.load %arg8[%c0_52, %c0_53] : memref<8x16xf32, #tpu.memory_space<vmem>>, vector<4x1xf32>
      tpu.vector_store %arg8[%c0_52, %c0_53], %46 {strides = array<i32>} : memref<8x16xf32, #tpu.memory_space<vmem>>, vector<4x1xf32>,
    } else {
    }
    %c0_10 = arith.constant 0 : index
    %c0_11 = arith.constant 0 : index
    %11 = vector.load %arg8[%c0_10, %c0_11] : memref<8x16xf32, #tpu.memory_space<vmem>>, vector<8x16xf32>
    %c0_12 = arith.constant 0 : index
    %c0_13 = arith.constant 0 : index
    %c0_14 = arith.constant 0 : index
    %12 = vector.load %arg5[%c0_12, %c0_13, %c0_14] : memref<3x8x8xf32, #tpu.memory_space<vmem>>, vector<1x8x8xf32>
    %13 = vector.shape_cast %12 : vector<1x8x8xf32> to vector<8x8xf32>
    %cst_15 = arith.constant dense<0.000000e+00> : vector<8x16xf32>
    %14 = tpu.matmul %13, %11, %cst_15 {dimension_numbers = #tpu.dot_dimension_numbers<[1], [0], [0], [1], [0, 0, 1, 1], [], []>} : vector<8x8xf32>, vector<8x16xf32>, vector<8x16xf32> -> vector<8x16xf32>
    %c0_16 = arith.constant 0 : index
    %c0_17 = arith.constant 0 : index
    %c0_18 = arith.constant 0 : index
    %15 = vector.load %arg2[%c0_16, %c0_17, %c0_18] : memref<1x4x16xf32, #tpu.memory_space<vmem>>, vector<1x4x16xf32>
    %16 = vector.shape_cast %15 : vector<1x4x16xf32> to vector<4x16xf32>
    %c0_19 = arith.constant 0 : index
    %c0_20 = arith.constant 0 : index
    %17 = vector.load %arg8[%c0_19, %c0_20] : memref<8x16xf32, #tpu.memory_space<vmem>>, vector<4x16xf32>
    tpu.vector_store %arg8[%c0_19, %c0_20], %16 {strides = array<i32>} : memref<8x16xf32, #tpu.memory_space<vmem>>, vector<4x16xf32>,
    %c0_21 = arith.constant 0 : index
    %c0_22 = arith.constant 0 : index
    %18 = vector.load %arg8[%c0_21, %c0_22] : memref<8x16xf32, #tpu.memory_space<vmem>>, vector<8x16xf32>
    %c1_23 = arith.constant 1 : index
    %c0_24 = arith.constant 0 : index
    %c0_25 = arith.constant 0 : index
    %19 = vector.load %arg5[%c1_23, %c0_24, %c0_25] : memref<3x8x8xf32, #tpu.memory_space<vmem>>, vector<1x8x8xf32>
    %20 = vector.shape_cast %19 : vector<1x8x8xf32> to vector<8x8xf32>
    %cst_26 = arith.constant dense<0.000000e+00> : vector<8x16xf32>
    %21 = tpu.matmul %20, %18, %cst_26 {dimension_numbers = #tpu.dot_dimension_numbers<[1], [0], [0], [1], [0, 0, 1, 1], [], []>} : vector<8x8xf32>, vector<8x16xf32>, vector<8x16xf32> -> vector<8x16xf32>
    %22 = arith.addf %14, %21 : vector<8x16xf32>
    %c0_27 = arith.constant 0 : index
    %c0_28 = arith.constant 0 : index
    %c1_29 = arith.constant 1 : index
    %23 = vector.load %arg2[%c0_27, %c0_28, %c1_29] : memref<1x4x16xf32, #tpu.memory_space<vmem>>, vector<1x4x15xf32>
    %24 = vector.shape_cast %23 : vector<1x4x15xf32> to vector<4x15xf32>
    %c0_30 = arith.constant 0 : index
    %c0_31 = arith.constant 0 : index
    %25 = vector.load %arg8[%c0_30, %c0_31] : memref<8x16xf32, #tpu.memory_space<vmem>>, vector<4x15xf32>
    tpu.vector_store %arg8[%c0_30, %c0_31], %24 {strides = array<i32>} : memref<8x16xf32, #tpu.memory_space<vmem>>, vector<4x15xf32>,
    %c0_32 = arith.constant 0 : index
    %c0_33 = arith.constant 0 : index
    %c0_34 = arith.constant 0 : index
    %26 = vector.load %arg4[%c0_32, %c0_33, %c0_34] : memref<1x4x1xf32, #tpu.memory_space<vmem>>, vector<1x4x1xf32>
    %27 = vector.shape_cast %26 : vector<1x4x1xf32> to vector<4x1xf32>
    %c0_35 = arith.constant 0 : index
    %c15 = arith.constant 15 : index
    %28 = vector.load %arg8[%c0_35, %c15] : memref<8x16xf32, #tpu.memory_space<vmem>>, vector<4x1xf32>
    tpu.vector_store %arg8[%c0_35, %c15], %27 {strides = array<i32>} : memref<8x16xf32, #tpu.memory_space<vmem>>, vector<4x1xf32>,
    %c0_i32_36 = arith.constant 0 : i32
    %29 = arith.cmpi eq, %arg1, %c0_i32_36 : i32
    %30 = arith.extui %29 : i1 to i32
    %c0_i32_37 = arith.constant 0 : i32
    %31 = arith.cmpi ne, %30, %c0_i32_37 : i32
    scf.if %31 {
      %c0_49 = arith.constant 0 : index
      %c0_50 = arith.constant 0 : index
      %c14 = arith.constant 14 : index
      %45 = vector.load %arg2[%c0_49, %c0_50, %c14] : memref<1x4x16xf32, #tpu.memory_space<vmem>>, vector<1x4x1xf32>
      %46 = vector.shape_cast %45 : vector<1x4x1xf32> to vector<4x1xf32>
      %c0_51 = arith.constant 0 : index
      %c15_52 = arith.constant 15 : index
      %47 = vector.load %arg8[%c0_51, %c15_52] : memref<8x16xf32, #tpu.memory_space<vmem>>, vector<4x1xf32>
      tpu.vector_store %arg8[%c0_51, %c15_52], %46 {strides = array<i32>} : memref<8x16xf32, #tpu.memory_space<vmem>>, vector<4x1xf32>,
    } else {
    }
    %c0_38 = arith.constant 0 : index
    %c0_39 = arith.constant 0 : index
    %32 = vector.load %arg8[%c0_38, %c0_39] : memref<8x16xf32, #tpu.memory_space<vmem>>, vector<8x16xf32>
    %c2 = arith.constant 2 : index
    %c0_40 = arith.constant 0 : index
    %c0_41 = arith.constant 0 : index
    %33 = vector.load %arg5[%c2, %c0_40, %c0_41] : memref<3x8x8xf32, #tpu.memory_space<vmem>>, vector<1x8x8xf32>
    %34 = vector.shape_cast %33 : vector<1x8x8xf32> to vector<8x8xf32>
    %cst_42 = arith.constant dense<0.000000e+00> : vector<8x16xf32>
    %35 = tpu.matmul %34, %32, %cst_42 {dimension_numbers = #tpu.dot_dimension_numbers<[1], [0], [0], [1], [0, 0, 1, 1], [], []>} : vector<8x8xf32>, vector<8x16xf32>, vector<8x16xf32> -> vector<8x16xf32>
    %36 = arith.addf %22, %35 : vector<8x16xf32>
    %c0_43 = arith.constant 0 : index
    %c0_44 = arith.constant 0 : index
    %37 = vector.load %arg6[%c0_43, %c0_44] : memref<8x1xf32, #tpu.memory_space<vmem>>, vector<8x1xf32>
    %38 = vector.broadcast %37 : vector<8x1xf32> to vector<8x16xf32>
    %39 = arith.addf %36, %38 : vector<8x16xf32>
    %cst_45 = arith.constant 0.000000e+00 : f32
    %40 = vector.broadcast %cst_45 : f32 to vector<8x16xf32>
    %41 = arith.maximumf %39, %40 : vector<8x16xf32>
    %c0_46 = arith.constant 0 : index
    %c0_47 = arith.constant 0 : index
    %c0_48 = arith.constant 0 : index
    %42 = vector.load %arg7[%c0_46, %c0_47, %c0_48] : memref<1x8x16xf32, #tpu.memory_space<vmem>>, vector<1x8x16xf32>
    %43 = vector.shape_cast %42 : vector<1x8x16xf32> to vector<8x16xf32>
    %44 = vector.shape_cast %41 : vector<8x16xf32> to vector<1x8x16xf32>
    tpu.vector_store %arg7[%c0_46, %c0_47, %c0_48], %44 {strides = array<i32>} : memref<1x8x16xf32, #tpu.memory_space<vmem>>, vector<1x8x16xf32>,
    return
  }
  func.func @transform_0(%arg0: i32, %arg1: i32) -> (i32, i32, i32) {
    %c0_i32 = arith.constant 0 : i32
    %c0_i32_0 = arith.constant 0 : i32
    %c0_i32_1 = arith.constant 0 : i32
    return %arg0, %c0_i32, %c0_i32_0 : i32, i32, i32
  }
  func.func @transform_1(%arg0: i32, %arg1: i32) -> (i32, i32, i32) {
    %c0_i32 = arith.constant 0 : i32
    %c0_i32_0 = arith.constant 0 : i32
    %c0_i32_1 = arith.constant 0 : i32
    %c0_i32_2 = arith.constant 0 : i32
    return %c0_i32, %c0_i32_0, %c0_i32_1 : i32, i32, i32
  }
  func.func @transform_2(%arg0: i32, %arg1: i32) -> (i32, i32, i32) {
    %c0_i32 = arith.constant 0 : i32
    %c0_i32_0 = arith.constant 0 : i32
    %c0_i32_1 = arith.constant 0 : i32
    %c0_i32_2 = arith.constant 0 : i32
    return %c0_i32, %c0_i32_0, %c0_i32_1 : i32, i32, i32
  }
  func.func @transform_3(%arg0: i32, %arg1: i32) -> (i32, i32, i32) {
    %c0_i32 = arith.constant 0 : i32
    %c0_i32_0 = arith.constant 0 : i32
    %c0_i32_1 = arith.constant 0 : i32
    %c0_i32_2 = arith.constant 0 : i32
    return %c0_i32, %c0_i32_0, %c0_i32_1 : i32, i32, i32
  }
  func.func @transform_4(%arg0: i32, %arg1: i32) -> (i32, i32) {
    %c0_i32 = arith.constant 0 : i32
    %c0_i32_0 = arith.constant 0 : i32
    %c0_i32_1 = arith.constant 0 : i32
    return %c0_i32, %c0_i32_0 : i32, i32
  }
  func.func @transform_5(%arg0: i32, %arg1: i32) -> (i32, i32, i32) {
    %c0_i32 = arith.constant 0 : i32
    %c0_i32_0 = arith.constant 0 : i32
    %c0_i32_1 = arith.constant 0 : i32
    return %arg0, %c0_i32, %c0_i32_0 : i32, i32, i32
  }
}

</mosaic_0001>

<llo_original>
// kernel: tpu_custom_call.1
$region0: #{tpu_custom_call.1}
  #allocation0 [shape = 'u32[]', space=smem, size = 0x4, offset = 0x4, fixed_abs, tag = 'smem constant byte address 0x4 - core index']
  #allocation1 [shape = 'u32[144,128]{1,0:T(1,128)}', space=vmem, size = 0x12000, scoped, tag = 'internal scratch']
  #allocation2 [shape = 'f32[8,16]{1,0:T(8,128)}', space=vmem, size = 0x1000, scoped, tag = 'scratch operand']
  %s0 = inlined_call_operand.hbm [shape: f32[2,4,16], index: 0, kind: input, shape index: {}]
  %s1 = inlined_call_operand.vmem [shape: f32[1,4,1], index: 1, kind: input, shape index: {}]
  %s2 = inlined_call_operand.vmem [shape: f32[1,4,1], index: 2, kind: input, shape index: {}]
  %s3 = inlined_call_operand.vmem [shape: f32[3,8,8], index: 3, kind: input, shape index: {}]
  %s4 = inlined_call_operand.vmem [shape: f32[8,1], index: 4, kind: input, shape index: {}]
  %s5 = inlined_call_operand.hbm [shape: f32[2,8,16], index: 5, kind: output, shape index: {}]
  %s6 = sld [smem:[#allocation0]]
  $region65: #{tpu_custom_call.1} parent=0
    _
  %s8 = ssub.s32 1, %s6
  %s9 = scalar_select 0, %s8, %s6
  $region1: #{tpu_custom_call.1} parent=0
    #allocation3 [shape = 'u8[4096]{0}', space=vmem, size = 0x1000, scoped, tag = 'input window, operand 0']
    #allocation4 [shape = 's32[2]{0}', space=sflag, size = 0x8, scoped, tag = 'scoped memory for tpu_custom_call.1']
    #allocation5 [shape = 's32[2]{0}', space=sflag, size = 0x8, scoped, tag = 'scoped memory for tpu_custom_call.1']
    #allocation6 [shape = 'u8[8192]{0}', space=vmem, size = 0x2000, scoped, tag = 'output window, operand 0']
    %10 = vsyncpa [#allocation4], 0
    %s11 = scalar_lea.sflag [#allocation4], 1
    %12 = vsyncpa %s11, 0
    %13 = vsyncpa [#allocation5], 0
    %s14 = scalar_lea.sflag [#allocation5], 1
    %15 = vsyncpa %s14, 0
    loop: start=0, step=1, limit=4
    $region2: #{tpu_custom_call.1} parent=1 // loop_pre_header
      _
    $region3: #{tpu_custom_call.1} parent=1 // loop_header
      %s17 = sphi 0, %s21
      %p18 = scmp.ge.s32.totalorder %s17, 4
      %s24 = sphi 0, %s36
      %s25 = sphi 0, %s32
      %s26 = sphi 0, %s24
      %s27 = sphi 0, %s25
      %s28 = sphi 0, %s26
      %s29 = sphi 0, %s27
      %s39 = sphi 0, %s41
      %s42 = sphi 0, %s39
      %s43 = sphi 0, %s42
      %s59 = sphi 0, %s43
      %s63 = sphi 0, %s63
      %s65 = sphi 0, %s63
      %s66 = sphi 0, %s65
      %s80 = sphi 0, %s66
      %s84 = sphi 0, %s84
      %s86 = sphi 0, %s84
      %s87 = sphi 0, %s86
      %s101 = sphi 0, %s87
      %s105 = sphi 0, %s105
      %s107 = sphi 0, %s105
      %s108 = sphi 0, %s107
      %s122 = sphi 0, %s108
      %s126 = sphi 0, %s126
      %s128 = sphi 0, %s126
      %s129 = sphi 0, %s128
      %s143 = sphi 0, %s129
      %s149 = sphi 0, %s151
      %s152 = sphi 0, %s149
      %s153 = sphi 0, %s152
      %s169 = sphi 0, %s153
    $region4: #{tpu_custom_call.1} parent=1 // loop_header_branch
      %20 = sbr.rel (%p18) target = $region8
    $region5: #{tpu_custom_call.1} parent=1 // loop_body
      %s22 = ssub.s32 %s17, 1
      %s23 = ssub.s32 %s17, 2
      %s30 = sadd.s32 1, %s25
      %p31 = scmp.ge.s32.totalorder %s30, 1
      %s32 = scalar_select %p31, 0, %s30
      %s33 = sadd.s32 1, %s24
      %s34 = scalar_select %p31, %s33, %s24
      %p35 = scmp.ge.s32.totalorder %s34, 2
      %s36 = scalar_select %p35, 0, %s34
      %s37 = ssub.s32 %s24, %s36
      %p38 = scmp.eq.s32.totalorder %s37, 0
      %s40 = sadd.s32 %s39, 1
      %s41 = scalar_select %p38, %s39, %s40
      %p44 = pneg %p38
      %p45 = scmp.eq.s32.totalorder %s17, 1
      %p46 = por %p44, %p45
      %p47 = scmp.ne.s32.totalorder %s39, %s42
      %p48 = scmp.eq.s32.totalorder %s17, 0
      %p49 = por %p47, %p48
      %p50 = scmp.ne.s32.totalorder %s39, %s42
      %p51 = scmp.eq.s32.totalorder %s22, 1
      %p52 = por %p50, %p51
      %p53 = scmp.ne.s32.totalorder %s42, %s43
      %p54 = scmp.eq.s32.totalorder %s22, 0
      %p55 = por %p53, %p54
      %p56 = scmp.ne.s32.totalorder %s42, %s43
      %p57 = scmp.eq.s32.totalorder %s23, 1
      %p58 = por %p56, %p57
      %p60 = scmp.ne.s32.totalorder %s43, %s59
      %p61 = scmp.eq.s32.totalorder %s23, 0
      %p62 = por %p60, %p61
      %s64 = sadd.s32 %s63, 1
      %p67 = scmp.eq.s32.totalorder %s17, 1
      %p68 = scmp.ne.s32.totalorder %s63, %s65
      %p69 = scmp.eq.s32.totalorder %s17, 0
      %p70 = por %p68, %p69
      %p71 = scmp.ne.s32.totalorder %s63, %s65
      %p72 = scmp.eq.s32.totalorder %s22, 1
      %p73 = por %p71, %p72
      %p74 = scmp.ne.s32.totalorder %s65, %s66
      %p75 = scmp.eq.s32.totalorder %s22, 0
      %p76 = por %p74, %p75
      %p77 = scmp.ne.s32.totalorder %s65, %s66
      %p78 = scmp.eq.s32.totalorder %s23, 1
      %p79 = por %p77, %p78
      %p81 = scmp.ne.s32.totalorder %s66, %s80
      %p82 = scmp.eq.s32.totalorder %s23, 0
      %p83 = por %p81, %p82
      %s85 = sadd.s32 %s84, 1
      %p88 = scmp.eq.s32.totalorder %s17, 1
      %p89 = scmp.ne.s32.totalorder %s84, %s86
      %p90 = scmp.eq.s32.totalorder %s17, 0
      %p91 = por %p89, %p90
      %p92 = scmp.ne.s32.totalorder %s84, %s86
      %p93 = scmp.eq.s32.totalorder %s22, 1
      %p94 = por %p92, %p93
      %p95 = scmp.ne.s32.totalorder %s86, %s87
      %p96 = scmp.eq.s32.totalorder %s22, 0
      %p97 = por %p95, %p96
      %p98 = scmp.ne.s32.totalorder %s86, %s87
      %p99 = scmp.eq.s32.totalorder %s23, 1
      %p100 = por %p98, %p99
      %p102 = scmp.ne.s32.totalorder %s87, %s101
      %p103 = scmp.eq.s32.totalorder %s23, 0
      %p104 = por %p102, %p103
      %s106 = sadd.s32 %s105, 1
      %p109 = scmp.eq.s32.totalorder %s17, 1
      %p110 = scmp.ne.s32.totalorder %s105, %s107
      %p111 = scmp.eq.s32.totalorder %s17, 0
      %p112 = por %p110, %p111
      %p113 = scmp.ne.s32.totalorder %s105, %s107
      %p114 = scmp.eq.s32.totalorder %s22, 1
      %p115 = por %p113, %p114
      %p116 = scmp.ne.s32.totalorder %s107, %s108
      %p117 = scmp.eq.s32.totalorder %s22, 0
      %p118 = por %p116, %p117
      %p119 = scmp.ne.s32.totalorder %s107, %s108
      %p120 = scmp.eq.s32.totalorder %s23, 1
      %p121 = por %p119, %p120
      %p123 = scmp.ne.s32.totalorder %s108, %s122
      %p124 = scmp.eq.s32.totalorder %s23, 0
      %p125 = por %p123, %p124
      %s127 = sadd.s32 %s126, 1
      %p130 = scmp.eq.s32.totalorder %s17, 1
      %p131 = scmp.ne.s32.totalorder %s126, %s128
      %p132 = scmp.eq.s32.totalorder %s17, 0
      %p133 = por %p131, %p132
      %p134 = scmp.ne.s32.totalorder %s126, %s128
      %p135 = scmp.eq.s32.totalorder %s22, 1
      %p136 = por %p134, %p135
      %p137 = scmp.ne.s32.totalorder %s128, %s129
      %p138 = scmp.eq.s32.totalorder %s22, 0
      %p139 = por %p137, %p138
      %p140 = scmp.ne.s32.totalorder %s128, %s129
      %p141 = scmp.eq.s32.totalorder %s23, 1
      %p142 = por %p140, %p141
      %p144 = scmp.ne.s32.totalorder %s129, %s143
      %p145 = scmp.eq.s32.totalorder %s23, 0
      %p146 = por %p144, %p145
      %s147 = ssub.s32 %s24, %s36
      %p148 = scmp.eq.s32.totalorder %s147, 0
      %s150 = sadd.s32 %s149, 1
      %s151 = scalar_select %p148, %s149, %s150
      %p154 = pneg %p148
      %p155 = scmp.eq.s32.totalorder %s17, 1
      %p156 = por %p154, %p155
      %p157 = scmp.ne.s32.totalorder %s149, %s152
      %p158 = scmp.eq.s32.totalorder %s17, 0
      %p159 = por %p157, %p158
      %p160 = scmp.ne.s32.totalorder %s149, %s152
      %p161 = scmp.eq.s32.totalorder %s22, 1
      %p162 = por %p160, %p161
      %p163 = scmp.ne.s32.totalorder %s152, %s153
      %p164 = scmp.eq.s32.totalorder %s22, 0
      %p165 = por %p163, %p164
      %p166 = scmp.ne.s32.totalorder %s152, %s153
      %p167 = scmp.eq.s32.totalorder %s23, 1
      %p168 = por %p166, %p167
      %p170 = scmp.ne.s32.totalorder %s153, %s169
      %p171 = scmp.eq.s32.totalorder %s23, 0
      %p172 = por %p170, %p171
      %p173 = scmp.le.s32.totalorder 1, %s17
      %p174 = scmp.lt.s32.totalorder %s17, 3
      %p175 = pnand %p173, %p174
      %p176 = pneg %p175
      // Predicated region
      $region9: #{tpu_custom_call.1} parent=5 // pred_check
        _
      $region10: #{tpu_custom_call.1} parent=5 // pred_check_branch
        %178 = sbr.rel (%p175) target = $region12
      $region11: #{tpu_custom_call.1} parent=5 // pred_region
        %s179 = ssub.s32 %s17, 1
        // Predicated region
        $region13: #{tpu_custom_call.1} parent=11 // pred_check
          %p180 = pneg %p76
        $region14: #{tpu_custom_call.1} parent=11 // pred_check_branch
          %182 = sbr.rel (%p180) target = $region16
        $region15: #{tpu_custom_call.1} parent=11 // pred_region
          _
        $region16: #{tpu_custom_call.1} parent=11 // pred_fallthru
          _
        // Predicated region
        $region17: #{tpu_custom_call.1} parent=11 // pred_check
          %p183 = pneg %p97
        $region18: #{tpu_custom_call.1} parent=11 // pred_check_branch
          %185 = sbr.rel (%p183) target = $region20
        $region19: #{tpu_custom_call.1} parent=11 // pred_region
          _
        $region20: #{tpu_custom_call.1} parent=11 // pred_fallthru
          _
        // Predicated region
        $region21: #{tpu_custom_call.1} parent=11 // pred_check
          %p186 = pneg %p118
        $region22: #{tpu_custom_call.1} parent=11 // pred_check_branch
          %188 = sbr.rel (%p186) target = $region24
        $region23: #{tpu_custom_call.1} parent=11 // pred_region
          _
        $region24: #{tpu_custom_call.1} parent=11 // pred_fallthru
          _
        // Predicated region
        $region25: #{tpu_custom_call.1} parent=11 // pred_check
          %p189 = pneg %p139
        $region26: #{tpu_custom_call.1} parent=11 // pred_check_branch
          %191 = sbr.rel (%p189) target = $region28
        $region27: #{tpu_custom_call.1} parent=11 // pred_region
          _
        $region28: #{tpu_custom_call.1} parent=11 // pred_fallthru
          _
      $region12: #{tpu_custom_call.1} parent=5 // pred_fallthru
        _
      %p192 = scmp.lt.s32.totalorder %s17, 2
      // Predicated region
      $region29: #{tpu_custom_call.1} parent=5 // pred_check
        %p193 = pneg %p192
      $region30: #{tpu_custom_call.1} parent=5 // pred_check_branch
        %195 = sbr.rel (%p193) target = $region32
      $region31: #{tpu_custom_call.1} parent=5 // pred_region
        // Predicated region
        $region33: #{tpu_custom_call.1} parent=31 // pred_check
          %p196 = pneg %p49
        $region34: #{tpu_custom_call.1} parent=31 // pred_check_branch
          %198 = sbr.rel (%p196) target = $region36
        $region35: #{tpu_custom_call.1} parent=31 // pred_region
          %s199 = sand.u32 %s39, 1
          %s200 = scalar_lea.sflag [#allocation4], %s199
          %s201 = sand.u32 %s39, 1
          %s202 = smul.addr %s201, 4
          %s203 = scalar_lea.vmem [#allocation3], %s202
          %s205 = ssub.s32 64, 64
          %206 = vsyncadd %s200, %s205
          %s207 = smul.addr %s24, 64
          %s208 = scalar_lea.hbm %s0, %s207
          %s210 = sshll.u32 %s203, 4
          %s211 = int_to_ptr.vmem [resolvable:$true] %s210
          %213 = dma.hbm_to_vmem [thread:$0]  %s208, 64, %s211, %s200
        $region36: #{tpu_custom_call.1} parent=31 // pred_fallthru
          _
      $region32: #{tpu_custom_call.1} parent=5 // pred_fallthru
        _
      %p214 = scmp.le.s32.totalorder 1, %s17
      %p215 = scmp.lt.s32.totalorder %s17, 3
      %p216 = pnand %p214, %p215
      %p217 = pneg %p216
      // Predicated region
      $region37: #{tpu_custom_call.1} parent=5 // pred_check
        _
      $region38: #{tpu_custom_call.1} parent=5 // pred_check_branch
        %219 = sbr.rel (%p216) target = $region40
      $region39: #{tpu_custom_call.1} parent=5 // pred_region
        %s220 = ssub.s32 %s17, 1
        %s221 = sand.u32 %s42, 1
        %s222 = scalar_lea.sflag [#allocation4], %s221
        %s223 = sand.u32 %s42, 1
        %s224 = smul.addr %s223, 4
        %s225 = scalar_lea.vmem [#allocation3], %s224
        // Predicated region
        $region41: #{tpu_custom_call.1} parent=39 // pred_check
          %p226 = pneg %p55
        $region42: #{tpu_custom_call.1} parent=39 // pred_check_branch
          %228 = sbr.rel (%p226) target = $region44
        $region43: #{tpu_custom_call.1} parent=39 // pred_region
          %229 = dma.done %s222, 64
        $region44: #{tpu_custom_call.1} parent=39 // pred_fallthru
          _
        %s230 = sand.u32 %s42, 1
        %s231 = scalar_lea.sflag [#allocation4], %s230
        %s232 = sand.u32 %s42, 1
        %s233 = smul.addr %s232, 4
        %s234 = scalar_lea.vmem [#allocation3], %s233
        %p235 = pneg %p55
        %p236 = pneg %p52
        %p237 = pneg %p76
        %p238 = pneg %p73
        %p239 = pneg %p97
        %p240 = pneg %p94
        %p241 = pneg %p118
        %p242 = pneg %p115
        %p243 = pneg %p139
        %p244 = pneg %p136
        %p245 = pneg %p165
        %p246 = pneg %p162
        %s247 = sand.u32 %s152, 1
        %s248 = scalar_lea.sflag [#allocation5], %s247
        %s249 = sand.u32 %s152, 1
        %s250 = smul.addr %s249, 8
        %s251 = scalar_lea.vmem [#allocation6], %s250
        %vm252 = vcmask 125952
        %253 = vst.msk [vmem:[#allocation2 + $0x4] sm:$0xf] %vm252, 0.0
        %v254 = vld [vmem:[%s225] sm:$0xf]
        %256 = vrot.lane.b32.xlu0 %v254, 1
        %v257 = vpop.permute.xlu0 %256
        %vm259 = vcmask 125960
        %260 = vst.msk [vmem:[#allocation2] sm:$0xf] %vm259, %v257
        %v261 = vld [vmem:[%s1] sm:$0xf]
        %vm262 = vcmask 3072
        %263 = vst.msk [vmem:[#allocation2] sm:$0xf] %vm262, %v261
        %p264 = scmp.eq.s32.totalorder %s27, 0
        // Predicated region
        $region45: #{tpu_custom_call.1} parent=39 // pred_check
          %p265 = pneg %p264
        $region46: #{tpu_custom_call.1} parent=39 // pred_check_branch
          %267 = sbr.rel (%p265) target = $region48
        $region47: #{tpu_custom_call.1} parent=39 // pred_region
          %v268 = vld [vmem:[%s225] sm:$0xf]
          %270 = vrot.lane.b32.xlu0 %v268, 127
          %v271 = vpop.permute.xlu0 %270
          %273 = vst.msk [vmem:[#allocation2] sm:$0xf] %vm262, %v271
        $region48: #{tpu_custom_call.1} parent=39 // pred_fallthru
          _
        %v274 = vld [vmem:[#allocation2] sm:$0xff]
        %v275 = vld [vmem:[%s3] sm:$0xff]
        %v276 = vld [vmem:[%s225] sm:$0xf]
        %277 = vst.msk [vmem:[#allocation2] sm:$0xf] %vm252, %v276
        %v278 = vld [vmem:[#allocation2] sm:$0xff]
        %s279 = scalar_lea.vmem %s3, 8
        %v280 = vld [vmem:[%s279] sm:$0xff]
        %vm281 = vcmask 64512
        %v283 = vsel %vm281, %v280, 0
        %285 = vmatprep.subr.mxu0 0.0
        %286 = vmatpush1.msra.mxu0 %v278
        %287 = vmatprep.subr.mxu0 0.0
        %288 = vmatpush1.msra.mxu0 0.0
        %289 = vmatprep.subr.mxu0 0.0
        %290 = vmatpush1.msra.mxu0 0.0
        %291 = vmatprep.subr.mxu0 0.0
        %292 = vmatpush1.msra.mxu0 0.0
        %293 = vmatprep.subr.mxu0 0.0
        %294 = vmatpush1.msra.mxu0 0.0
        %295 = vmatprep.subr.mxu0 0.0
        %296 = vmatpush1.msra.mxu0 0.0
        %297 = vmatprep.subr.mxu0 0.0
        %298 = vmatpush1.msra.mxu0 0.0
        %299 = vmatprep.subr.mxu0 0.0
        %300 = vmatpush1.msra.mxu0 0.0
        %301 = vmatprep.subr.mxu0 0.0
        %302 = vmatpush1.msra.mxu0 0.0
        %303 = vmatprep.subr.mxu0 0.0
        %304 = vmatpush1.msra.mxu0 0.0
        %305 = vmatprep.subr.mxu0 0.0
        %306 = vmatpush1.msra.mxu0 0.0
        %307 = vmatprep.subr.mxu0 0.0
        %308 = vmatpush1.msra.mxu0 0.0
        %309 = vmatprep.subr.mxu0 0.0
        %310 = vmatpush1.msra.mxu0 0.0
        %311 = vmatprep.subr.mxu0 0.0
        %312 = vmatpush1.msra.mxu0 0.0
        %313 = vmatprep.subr.mxu0 0.0
        %314 = vmatpush1.msra.mxu0 0.0
        %315 = vmatprep.subr.mxu0 0.0
        %316 = vmatpush1.msra.mxu0 0.0
        %317 = vmatprep.subr.mxu0 0.0
        %318 = vmatpush1.msra.mxu0 0.0
        %319 = vmatprep.subr.mxu0 0.0
        %320 = vmatpush1.msra.mxu0 0.0
        %321 = vmatprep.subr.mxu0 0.0
        %322 = vmatpush1.msra.mxu0 0.0
        %323 = vmatprep.subr.mxu0 0.0
        %324 = vmatpush1.msra.mxu0 0.0
        %325 = vmatprep.subr.mxu0 0.0
        %326 = vmatpush1.msra.mxu0 0.0
        %327 = vmatprep.subr.mxu0 0.0
        %328 = vmatpush1.msra.mxu0 0.0
        %329 = vmatprep.subr.mxu0 0.0
        %330 = vmatpush1.msra.mxu0 0.0
        %331 = vmatprep.subr.mxu0 0.0
        %332 = vmatpush1.msra.mxu0 0.0
        %333 = vmatprep.subr.mxu0 0.0
        %334 = vmatpush1.msra.mxu0 0.0
        %335 = vmatprep.subr.mxu0 0.0
        %336 = vmatpush1.msra.mxu0 0.0
        %337 = vmatprep.subr.mxu0 0.0
        %338 = vmatpush1.msra.mxu0 0.0
        %339 = vmatprep.subr.mxu0 0.0
        %340 = vmatpush1.msra.mxu0 0.0
        %341 = vmatprep.subr.mxu0 0.0
        %342 = vmatpush1.msra.mxu0 0.0
        %343 = vmatprep.subr.mxu0 0.0
        %344 = vmatpush1.msra.mxu0 0.0
        %345 = vmatprep.subr.mxu0 0.0
        %346 = vmatpush1.msra.mxu0 0.0
        %347 = vmatprep.subr.mxu0 0.0
        %348 = vmatpush1.msra.mxu0 0.0
        %349 = vmatprep.mubr.f32.mxu0 0.0
        %350 = vmatmul.mubr.f32.gmra.mrb[0].mxu0 %v283
        %v351 = vpop.f32.mrb[0].mxu0
        %v352 = vadd.f32 0.0, %v351
        %v353 = vpop.f32.mrb[0].mxu0
        %354 = vdwg.mxu0
        %v356 = vsel %vm281, %v275, 0
        %358 = vmatprep.subr.mxu0 0.0
        %359 = vmatpush1.msra.mxu0 %v274
        %360 = vmatprep.subr.mxu0 0.0
        %361 = vmatpush1.msra.mxu0 0.0
        %362 = vmatprep.subr.mxu0 0.0
        %363 = vmatpush1.msra.mxu0 0.0
        %364 = vmatprep.subr.mxu0 0.0
        %365 = vmatpush1.msra.mxu0 0.0
        %366 = vmatprep.subr.mxu0 0.0
        %367 = vmatpush1.msra.mxu0 0.0
        %368 = vmatprep.subr.mxu0 0.0
        %369 = vmatpush1.msra.mxu0 0.0
        %370 = vmatprep.subr.mxu0 0.0
        %371 = vmatpush1.msra.mxu0 0.0
        %372 = vmatprep.subr.mxu0 0.0
        %373 = vmatpush1.msra.mxu0 0.0
        %374 = vmatprep.subr.mxu0 0.0
        %375 = vmatpush1.msra.mxu0 0.0
        %376 = vmatprep.subr.mxu0 0.0
        %377 = vmatpush1.msra.mxu0 0.0
        %378 = vmatprep.subr.mxu0 0.0
        %379 = vmatpush1.msra.mxu0 0.0
        %380 = vmatprep.subr.mxu0 0.0
        %381 = vmatpush1.msra.mxu0 0.0
        %382 = vmatprep.subr.mxu0 0.0
        %383 = vmatpush1.msra.mxu0 0.0
        %384 = vmatprep.subr.mxu0 0.0
        %385 = vmatpush1.msra.mxu0 0.0
        %386 = vmatprep.subr.mxu0 0.0
        %387 = vmatpush1.msra.mxu0 0.0
        %388 = vmatprep.subr.mxu0 0.0
        %389 = vmatpush1.msra.mxu0 0.0
        %390 = vmatprep.subr.mxu0 0.0
        %391 = vmatpush1.msra.mxu0 0.0
        %392 = vmatprep.subr.mxu0 0.0
        %393 = vmatpush1.msra.mxu0 0.0
        %394 = vmatprep.subr.mxu0 0.0
        %395 = vmatpush1.msra.mxu0 0.0
        %396 = vmatprep.subr.mxu0 0.0
        %397 = vmatpush1.msra.mxu0 0.0
        %398 = vmatprep.subr.mxu0 0.0
        %399 = vmatpush1.msra.mxu0 0.0
        %400 = vmatprep.subr.mxu0 0.0
        %401 = vmatpush1.msra.mxu0 0.0
        %402 = vmatprep.subr.mxu0 0.0
        %403 = vmatpush1.msra.mxu0 0.0
        %404 = vmatprep.subr.mxu0 0.0
        %405 = vmatpush1.msra.mxu0 0.0
        %406 = vmatprep.subr.mxu0 0.0
        %407 = vmatpush1.msra.mxu0 0.0
        %408 = vmatprep.subr.mxu0 0.0
        %409 = vmatpush1.msra.mxu0 0.0
        %410 = vmatprep.subr.mxu0 0.0
        %411 = vmatpush1.msra.mxu0 0.0
        %412 = vmatprep.subr.mxu0 0.0
        %413 = vmatpush1.msra.mxu0 0.0
        %414 = vmatprep.subr.mxu0 0.0
        %415 = vmatpush1.msra.mxu0 0.0
        %416 = vmatprep.subr.mxu0 0.0
        %417 = vmatpush1.msra.mxu0 0.0
        %418 = vmatprep.subr.mxu0 0.0
        %419 = vmatpush1.msra.mxu0 0.0
        %420 = vmatprep.subr.mxu0 0.0
        %421 = vmatpush1.msra.mxu0 0.0
        %422 = vmatprep.mubr.f32.mxu0 0.0
        %423 = vmatmul.mubr.f32.gmra.mrb[0].mxu0 %v356
        %v424 = vpop.f32.mrb[0].mxu0
        %v425 = vadd.f32 %v352, %v424
        %v426 = vpop.f32.mrb[0].mxu0
        %427 = vdwg.mxu0
        %v428 = vld [vmem:[%s225] sm:$0xf]
        %430 = vrot.lane.b32.xlu0 %v428, 127
        %v431 = vpop.permute.xlu0 %430
        %vm433 = vcmask 117760
        %434 = vst.msk [vmem:[#allocation2] sm:$0xf] %vm433, %v431
        %v435 = vld [vmem:[%s2] sm:$0xf]
        %437 = vrot.lane.b32.xlu0 %v435, 15
        %v438 = vpop.permute.xlu0 %437
        %vm440 = vcmask 126072
        %441 = vst.msk [vmem:[#allocation2] sm:$0xf] %vm440, %v438
        // Predicated region
        $region49: #{tpu_custom_call.1} parent=39 // pred_check
          %p442 = pneg %p264
        $region50: #{tpu_custom_call.1} parent=39 // pred_check_branch
          %444 = sbr.rel (%p442) target = $region52
        $region51: #{tpu_custom_call.1} parent=39 // pred_region
          %v445 = vld [vmem:[%s225] sm:$0xf]
          %447 = vrot.lane.b32.xlu0 %v445, 1
          %v448 = vpop.permute.xlu0 %447
          %450 = vst.msk [vmem:[#allocation2] sm:$0xf] %vm440, %v448
        $region52: #{tpu_custom_call.1} parent=39 // pred_fallthru
          _
        %v451 = vld [vmem:[#allocation2] sm:$0xff]
        %s452 = scalar_lea.vmem %s3, 16
        %v453 = vld [vmem:[%s452] sm:$0xff]
        %v455 = vsel %vm281, %v453, 0
        %457 = vmatprep.subr.mxu0 0.0
        %458 = vmatpush1.msra.mxu0 %v451
        %459 = vmatprep.subr.mxu0 0.0
        %460 = vmatpush1.msra.mxu0 0.0
        %461 = vmatprep.subr.mxu0 0.0
        %462 = vmatpush1.msra.mxu0 0.0
        %463 = vmatprep.subr.mxu0 0.0
        %464 = vmatpush1.msra.mxu0 0.0
        %465 = vmatprep.subr.mxu0 0.0
        %466 = vmatpush1.msra.mxu0 0.0
        %467 = vmatprep.subr.mxu0 0.0
        %468 = vmatpush1.msra.mxu0 0.0
        %469 = vmatprep.subr.mxu0 0.0
        %470 = vmatpush1.msra.mxu0 0.0
        %471 = vmatprep.subr.mxu0 0.0
        %472 = vmatpush1.msra.mxu0 0.0
        %473 = vmatprep.subr.mxu0 0.0
        %474 = vmatpush1.msra.mxu0 0.0
        %475 = vmatprep.subr.mxu0 0.0
        %476 = vmatpush1.msra.mxu0 0.0
        %477 = vmatprep.subr.mxu0 0.0
        %478 = vmatpush1.msra.mxu0 0.0
        %479 = vmatprep.subr.mxu0 0.0
        %480 = vmatpush1.msra.mxu0 0.0
        %481 = vmatprep.subr.mxu0 0.0
        %482 = vmatpush1.msra.mxu0 0.0
        %483 = vmatprep.subr.mxu0 0.0
        %484 = vmatpush1.msra.mxu0 0.0
        %485 = vmatprep.subr.mxu0 0.0
        %486 = vmatpush1.msra.mxu0 0.0
        %487 = vmatprep.subr.mxu0 0.0
        %488 = vmatpush1.msra.mxu0 0.0
        %489 = vmatprep.subr.mxu0 0.0
        %490 = vmatpush1.msra.mxu0 0.0
        %491 = vmatprep.subr.mxu0 0.0
        %492 = vmatpush1.msra.mxu0 0.0
        %493 = vmatprep.subr.mxu0 0.0
        %494 = vmatpush1.msra.mxu0 0.0
        %495 = vmatprep.subr.mxu0 0.0
        %496 = vmatpush1.msra.mxu0 0.0
        %497 = vmatprep.subr.mxu0 0.0
        %498 = vmatpush1.msra.mxu0 0.0
        %499 = vmatprep.subr.mxu0 0.0
        %500 = vmatpush1.msra.mxu0 0.0
        %501 = vmatprep.subr.mxu0 0.0
        %502 = vmatpush1.msra.mxu0 0.0
        %503 = vmatprep.subr.mxu0 0.0
        %504 = vmatpush1.msra.mxu0 0.0
        %505 = vmatprep.subr.mxu0 0.0
        %506 = vmatpush1.msra.mxu0 0.0
        %507 = vmatprep.subr.mxu0 0.0
        %508 = vmatpush1.msra.mxu0 0.0
        %509 = vmatprep.subr.mxu0 0.0
        %510 = vmatpush1.msra.mxu0 0.0
        %511 = vmatprep.subr.mxu0 0.0
        %512 = vmatpush1.msra.mxu0 0.0
        %513 = vmatprep.subr.mxu0 0.0
        %514 = vmatpush1.msra.mxu0 0.0
        %515 = vmatprep.subr.mxu0 0.0
        %516 = vmatpush1.msra.mxu0 0.0
        %517 = vmatprep.subr.mxu0 0.0
        %518 = vmatpush1.msra.mxu0 0.0
        %519 = vmatprep.subr.mxu0 0.0
        %520 = vmatpush1.msra.mxu0 0.0
        %521 = vmatprep.mubr.f32.mxu0 0.0
        %522 = vmatmul.mubr.f32.gmra.mrb[0].mxu0 %v455
        %v523 = vpop.f32.mrb[0].mxu0
        %v524 = vadd.f32 0.0, %v523
        %v525 = vpop.f32.mrb[0].mxu0
        %526 = vdwg.mxu0
        %v527 = vadd.f32 %v425, %v524
        %v528 = vld [vmem:[%s4] sm:$0xff]
        %530 = vset.pattern.permute.xlu0 0
        %531 = vperm.xlu0 %530, %v528
        %v532 = vpop.permute.xlu0 %531
        %v534 = vadd.f32 %v527, %v532
        %v535 = vmax.f32 %v534, 0.0
        %vm536 = vcmask 130048
        %537 = vst.msk [vmem:[%s251] sm:$0xff] %vm536, %v535
        %s538 = sand.u32 %s152, 1
        %s539 = scalar_lea.sflag [#allocation5], %s538
        %s540 = sand.u32 %s152, 1
        %s541 = smul.addr %s540, 8
        %s542 = scalar_lea.vmem [#allocation6], %s541
        // Predicated region
        $region53: #{tpu_custom_call.1} parent=39 // pred_check
          %p543 = pneg %p162
        $region54: #{tpu_custom_call.1} parent=39 // pred_check_branch
          %545 = sbr.rel (%p543) target = $region56
        $region55: #{tpu_custom_call.1} parent=39 // pred_region
          %s547 = ssub.s32 128, 128
          %548 = vsyncadd %s539, %s547
          %s549 = smul.addr %s26, 128
          %s550 = scalar_lea.hbm %s5, %s549
          %s552 = sshll.u32 %s542, 4
          %s553 = int_to_ptr.vmem [resolvable:$true] %s552
          %555 = dma.vmem_to_hbm [thread:$0]  %s553, 128, %s550, %s539
        $region56: #{tpu_custom_call.1} parent=39 // pred_fallthru
          _
      $region40: #{tpu_custom_call.1} parent=5 // pred_fallthru
        _
      %p556 = scmp.le.s32.totalorder 2, %s17
      // Predicated region
      $region57: #{tpu_custom_call.1} parent=5 // pred_check
        %p557 = pneg %p556
      $region58: #{tpu_custom_call.1} parent=5 // pred_check_branch
        %559 = sbr.rel (%p557) target = $region60
      $region59: #{tpu_custom_call.1} parent=5 // pred_region
        %s560 = ssub.s32 %s17, 2
        // Predicated region
        $region61: #{tpu_custom_call.1} parent=59 // pred_check
          %p561 = pneg %p168
        $region62: #{tpu_custom_call.1} parent=59 // pred_check_branch
          %563 = sbr.rel (%p561) target = $region64
        $region63: #{tpu_custom_call.1} parent=59 // pred_region
          %s564 = sand.u32 %s153, 1
          %s565 = scalar_lea.sflag [#allocation5], %s564
          %s566 = sand.u32 %s153, 1
          %s567 = smul.addr %s566, 8
          %s568 = scalar_lea.vmem [#allocation6], %s567
          %569 = dma.done %s565, 128
        $region64: #{tpu_custom_call.1} parent=59 // pred_fallthru
          _
      $region60: #{tpu_custom_call.1} parent=5 // pred_fallthru
        _
    $region6: #{tpu_custom_call.1} parent=1 // loop_footer
      %s21 = sadd.s32 1, %s17
    $region7: #{tpu_custom_call.1} parent=1 // loop_footer_branch
      %16 = sbr.rel target = $region3
    $region8: #{tpu_custom_call.1} parent=1 // loop_exit
      _
    %570 = vsyncpa [#allocation4], 1
    %s571 = scalar_lea.sflag [#allocation4], 1
    %572 = vsyncpa %s571, 1
    %573 = vsyncpa [#allocation5], 1
    %s574 = scalar_lea.sflag [#allocation5], 1
    %575 = vsyncpa %s574, 1

</llo_original>
